<compile_context>
chip_gen: v6e
topology: v6e:2x2x1
jax: 0.10.0
libtpu: 0.0.40
codegen_flags: <defaults>
</compile_context>

<pallas_src>
import functools

import jax
import jax.numpy as jnp
from jax.experimental import pallas as pl
from jax.experimental.pallas import tpu as pltpu


LOG2E = 1.4426950408889634


def _pick_tile(n, preferred):
    """Largest divisor of n that is <= preferred and a multiple of 16 (bf16 sublane
    tile), else n itself (block == full dim is always legal)."""
    for t in range(min(preferred, n), 15, -1):
        if n % t == 0 and t % 16 == 0:
            return t
    # TODO(synk): for irregular N (e.g. ViT's 196/197 tokens) pad N to a multiple of 128
    # and mask padded kv positions to -inf instead of falling back to one full-size tile.
    return n


def _vmem_capacity_bytes():
    """Physical VMEM (64 MiB on v7x, 128 MiB on v5e/v6e); safe fallback if unknown."""
    try:
        info = pltpu.get_tpu_info()
        cap = getattr(info, "vmem_capacity_bytes", None)
        if cap:
            return int(cap)
    except Exception:
        pass
    return 64 * 1024 * 1024


def _kv_proj_kernel(x_ref, wkt_ref, wv_ref, kt_ref, v_ref, *, head_chunk):
    """Per (head-chunk, batch, row-tile) step: project x -> K^T, V (head-batched).

    x_ref:   (1, TN, C)       input rows
    wkt_ref: (hc, hd, C)      K weights in torch row layout -> K^T[h] = Wk[h] @ x^T
    wv_ref:  (hc, C, hd)      V weights (in x out)
    kt_ref:  (1, hc, hd, TN)  bf16, K pre-transposed (sequence on the lane axis)
    v_ref:   (1, hc, TN, hd)  bf16
    """
    x = x_ref[0]
    x_bf = x.astype(jnp.bfloat16)                      # (TN, C)
    # One XLU transpose per tile, shared by every K-head matmul in this chunk.
    xt_bf = jnp.transpose(x).astype(jnp.bfloat16)      # (C, TN)
    for h in range(head_chunk):
        # K^T: (hd, C) @ (C, TN) -> (hd, TN). Output columns = TN (>=128) -> full MXU
        # column occupancy and lane-dense, unmasked stores even when hd < 128.
        kt_ref[0, h] = jnp.dot(wkt_ref[h], xt_bf,
                               preferred_element_type=jnp.float32).astype(kt_ref.dtype)
        # V: (TN, C) @ (C, hd) -> (TN, hd); V must stay (seq, hd) for the P@V matmul.
        # TODO(synk): widen to one (TN, C) @ (C, hc*hd) matmul + per-head lane-slice
        # stores if kernel 1 ever shows up as MXU-bound.
        v_ref[0, h] = jnp.dot(x_bf, wv_ref[h],
                              preferred_element_type=jnp.float32).astype(v_ref.dtype)


def _flash_kernel(xq_ref, wq_ref, kt_ref, v_ref, wp_ref, bp_ref, o_ref,
                  q_sc, m_sc, l_sc, acc_sc, *, num_heads):
    """Flash attention (online exp2-softmax over kv tiles) with fused Q projection
    (at ki==0) and fused head-merge + output projection (at the last kv step).

    xq_ref: (1, TQ, C)        input rows for this q tile (resident across the kv loop)
    wq_ref: (nh, C, hd)       Q weights, scale*log2(e) folded in (bf16)
    kt_ref: (1, nh, hd, TK)   K^T tile (bf16)
    v_ref:  (1, nh, TK, hd)   V tile (bf16)
    wp_ref: (nh, hd, C)       output-projection weights (bf16), bp_ref: (1, C) f32 bias
    o_ref:  (1, TQ, C)
    scratch: q_sc (nh,TQ,hd) bf16; m_sc/l_sc (nh,TQ,1) f32; acc_sc (nh,TQ,hd) f32
    """
    ki = pl.program_id(2)

    @pl.when(ki == 0)
    def _init():
        # Fused Q projection: once per q tile, Q never round-trips through HBM.
        x = xq_ref[0].astype(jnp.bfloat16)              # (TQ, C)
        for h in range(num_heads):
            q_sc[h] = jnp.dot(x, wq_ref[h],
                              preferred_element_type=jnp.float32).astype(q_sc.dtype)
        m_sc[...] = jnp.full(m_sc.shape, -jnp.inf, dtype=m_sc.dtype)
        l_sc[...] = jnp.zeros(l_sc.shape, dtype=l_sc.dtype)
        acc_sc[...] = jnp.zeros(acc_sc.shape, dtype=acc_sc.dtype)

    q = q_sc[...]                                       # (nh, TQ, hd) bf16
    kt = kt_ref[0]                                      # (nh, hd, TK) bf16
    v = v_ref[0]                                        # (nh, TK, hd) bf16

    # Logits already carry the log2(e) factor -> softmax via exp2 (cheaper EUP path).
    s = jnp.einsum("hqd,hdk->hqk", q, kt, preferred_element_type=jnp.float32)

    m_prev = m_sc[...]
    m_new = jnp.maximum(m_prev, s.max(axis=-1, keepdims=True))
    alpha = jnp.exp2(m_prev - m_new)                    # f32
    p = jnp.exp2(s - m_new)                             # (nh, TQ, TK) f32
    l_sc[...] = alpha * l_sc[...] + p.sum(axis=-1, keepdims=True)
    acc_sc[...] = alpha * acc_sc[...] + jnp.einsum(
        "hqk,hkd->hqd", p.astype(jnp.bfloat16), v, preferred_element_type=jnp.float32)
    m_sc[...] = m_new

    @pl.when(ki == pl.num_programs(2) - 1)
    def _finalize():
        out_h = acc_sc[...] * pl.reciprocal(l_sc[...], approx=True)    # (nh, TQ, hd)
        # Fused head merge + output projection: sum_h out_h[h] @ Wproj[h] -> (TQ, C)
        proj = jnp.einsum("hqd,hdc->hqc", out_h.astype(jnp.bfloat16), wp_ref[...],
                          preferred_element_type=jnp.float32)
        # attn_drop / proj_drop: p = 0.0 and eval mode -> identity.
        o_ref[0] = (proj.sum(axis=0) + bp_ref[...]).astype(o_ref.dtype)


def global_attention(x, w_qkv, w_proj, b_proj, *, num_heads,
                     q_tile=None, kv_tile=None, row_tile=256):
    """x: (B, H, W, C).  w_qkv: (3C, C) torch-layout, w_proj: (C, C) torch-layout,
    b_proj: (C,).  Returns (B, H, W, C)."""
    B, H, W, C = x.shape
    N = H * W
    hd = C // num_heads
    scale = hd ** (-0.5)

    vmem_cap = _vmem_capacity_bytes()
    vmem_limit = int(vmem_cap * 3 // 4)
    big_vmem = vmem_cap >= 96 * 1024 * 1024          # v5e/v6e (128 MiB) vs v7x (64 MiB)

    # Larger q tiles on 128-MiB chips halve K/V HBM re-streaming; v7x stays at 256.
    if q_tile is None:
        q_tile = 512 if big_vmem else 256
    if kv_tile is None:
        kv_tile = 256

    tn = _pick_tile(N, row_tile)
    tq = _pick_tile(N, q_tile)
    tk = _pick_tile(N, kv_tile)
    kv_steps = N // tk
    kv_buffers = 3 if (big_vmem and kv_steps >= 3) else 2

    x_flat = x.reshape(B, N, C)

    # torch nn.Linear: y = x @ W.T; qkv rows are ordered [q | k | v], head h occupying
    # rows h*hd:(h+1)*hd within each block (matches the (B,N,3,nh,hd) reshape).
    wq_rows = w_qkv[0 * C:1 * C].reshape(num_heads, hd, C)
    wk_rows = w_qkv[1 * C:2 * C].reshape(num_heads, hd, C)
    wv_rows = w_qkv[2 * C:3 * C].reshape(num_heads, hd, C)

    # Q: (nh, C_in, hd) with the softmax scale AND log2(e) folded in (exp2 softmax).
    wq_h = (jnp.transpose(wq_rows, (0, 2, 1)) * (scale * LOG2E)).astype(jnp.bfloat16)
    # K: kept in torch row layout (nh, hd, C_in) so K^T[h] = Wk[h] @ x^T directly.
    wkt_h = wk_rows.astype(jnp.bfloat16)
    # V: (nh, C_in, hd).
    wv_h = jnp.transpose(wv_rows, (0, 2, 1)).astype(jnp.bfloat16)
    # Output projection split per head: y = sum_h attn_out_h @ wp_h[h].
    wp_h = jnp.transpose(w_proj).reshape(num_heads, hd, C).astype(jnp.bfloat16)
    bp = b_proj.reshape(1, C).astype(jnp.float32)

    # Head-chunk kernel 1 so resident weight VMEM scales with the chunk, not num_heads.
    # Chunk axis is outermost -> weights stay resident across all (batch, row) steps.
    weight_budget = max(vmem_limit // 6, 2 * C * hd * 2)
    hc = 1
    for c in range(1, num_heads + 1):
        if num_heads % c == 0 and (2 * c * C * hd * 2) <= weight_budget:
            hc = c

    # ---- Kernel 1: K^T / V projection into head-batched bf16 ----------------------
    kt_shape = jax.ShapeDtypeStruct((B, num_heads, hd, N), jnp.bfloat16)
    v_shape = jax.ShapeDtypeStruct((B, num_heads, N, hd), jnp.bfloat16)
    kt, v = pl.pallas_call(
        functools.partial(_kv_proj_kernel, head_chunk=hc),
        out_shape=(kt_shape, v_shape),
        grid_spec=pltpu.PrefetchScalarGridSpec(
            num_scalar_prefetch=0,
            grid=(num_heads // hc, B, N // tn),
            in_specs=[
                pl.BlockSpec((1, tn, C), lambda g, b, n: (b, n, 0)),
                # Weight blocks are grid-invariant within a head chunk -> single-buffer.
                pl.BlockSpec((hc, hd, C), lambda g, b, n: (g, 0, 0),
                             pipeline_mode=pl.Buffered(1)),
                pl.BlockSpec((hc, C, hd), lambda g, b, n: (g, 0, 0),
                             pipeline_mode=pl.Buffered(1)),
            ],
            out_specs=[
                pl.BlockSpec((1, hc, hd, tn), lambda g, b, n: (b, g, 0, n)),
                pl.BlockSpec((1, hc, tn, hd), lambda g, b, n: (b, g, n, 0)),
            ],
        ),
        compiler_params=pltpu.CompilerParams(
            dimension_semantics=("parallel", "parallel", "parallel"),
            vmem_limit_bytes=vmem_limit),
    )(x_flat, wkt_h, wv_h)

    # ---- Kernel 2: flash attention + fused Q projection + fused output projection --
    out_flat = pl.pallas_call(
        functools.partial(_flash_kernel, num_heads=num_heads),
        out_shape=jax.ShapeDtypeStruct((B, N, C), x.dtype),
        grid_spec=pltpu.PrefetchScalarGridSpec(
            num_scalar_prefetch=0,
            grid=(B, N // tq, kv_steps),
            in_specs=[
                # x tile for the fused Q projection: index ignores ki -> fetched once
                # per q tile and kept resident across the whole kv loop.
                pl.BlockSpec((1, tq, C), lambda b, qi, ki: (b, qi, 0)),
                pl.BlockSpec((num_heads, C, hd), lambda b, qi, ki: (0, 0, 0),
                             pipeline_mode=pl.Buffered(1)),
                pl.BlockSpec((1, num_heads, hd, tk), lambda b, qi, ki: (b, 0, 0, ki),
                             pipeline_mode=pl.Buffered(kv_buffers)),
                pl.BlockSpec((1, num_heads, tk, hd), lambda b, qi, ki: (b, 0, ki, 0),
                             pipeline_mode=pl.Buffered(kv_buffers)),
                pl.BlockSpec((num_heads, hd, C), lambda b, qi, ki: (0, 0, 0),
                             pipeline_mode=pl.Buffered(1)),
                pl.BlockSpec((1, C), lambda b, qi, ki: (0, 0),
                             pipeline_mode=pl.Buffered(1)),
            ],
            # Output last dim is C; lane-dense whenever C >= 128 (toy test uses C=32).
            out_specs=pl.BlockSpec((1, tq, C), lambda b, qi, ki: (b, qi, 0)),
            scratch_shapes=[
                pltpu.VMEM((num_heads, tq, hd), jnp.bfloat16),   # q (scale*log2e folded)
                pltpu.VMEM((num_heads, tq, 1), jnp.float32),     # m (running max, log2 domain)
                pltpu.VMEM((num_heads, tq, 1), jnp.float32),     # l (running sum)
                pltpu.VMEM((num_heads, tq, hd), jnp.float32),    # acc
            ],
        ),
        compiler_params=pltpu.CompilerParams(
            dimension_semantics=("parallel", "parallel", "arbitrary"),
            vmem_limit_bytes=vmem_limit),
    )(x_flat, wq_h, kt, v, wp_h, bp)

    return out_flat.reshape(B, H, W, C)


def reference_global_attention(x, w_qkv, w_proj, b_proj, *, num_heads):
    """Pure-JAX f32 reference matching the PyTorch forward (eval mode)."""
    B, H, W, C = x.shape
    N = H * W
    head_dim = C // num_heads
    scale = head_dim ** (-0.5)

    xf = x.reshape(B, N, C)
    qkv = xf @ w_qkv.T                                   # (B, N, 3C)
    qkv = qkv.reshape(B, N, 3, num_heads, head_dim)
    qkv = jnp.transpose(qkv, (2, 0, 3, 1, 4))            # (3, B, nh, N, hd)
    q, k, v = qkv[0], qkv[1], qkv[2]
    attn = jnp.einsum("bhnd,bhmd->bhnm", q, k) * scale
    attn = jax.nn.softmax(attn, axis=-1)
    out = jnp.einsum("bhnm,bhmd->bhnd", attn, v)
    out = jnp.transpose(out, (0, 2, 1, 3)).reshape(B, N, C)
    out = out @ w_proj.T + b_proj
    return out.reshape(B, H, W, C)


if __name__ == "__main__":
    key = jax.random.PRNGKey(0)
    B, H, W, C = 2, 8, 8, 32
    num_heads = 4

    k_x, k_qkv, k_proj, k_bias = jax.random.split(key, 4)
    x = jax.random.normal(k_x, (B, H, W, C), dtype=jnp.float32)
    # Deterministic synthetic parameters (torch Linear layout: (out_features, in_features)).
    w_qkv = jax.random.normal(k_qkv, (3 * C, C), dtype=jnp.float32) * 0.05
    w_proj = jax.random.normal(k_proj, (C, C), dtype=jnp.float32) * 0.05
    b_proj = jax.random.normal(k_bias, (C,), dtype=jnp.float32) * 0.05

    out = global_attention(x, w_qkv, w_proj, b_proj, num_heads=num_heads)
    out = jax.block_until_ready(out)

    ref = reference_global_attention(x, w_qkv, w_proj, b_proj, num_heads=num_heads)
    assert out.shape == (B, H, W, C)
    max_err = float(jnp.max(jnp.abs(out - ref)))
    # bf16 matmul operands (f32 accumulation) -> slightly looser tolerance than pure f32.
    assert jnp.allclose(out, ref, atol=2e-2, rtol=2e-2), f"mismatch vs reference (max err {max_err})"

    print("KERNEL_OK")
</pallas_src>

<mosaic_0001>
module attributes {stable_mosaic.version = 11 : i64} {
  func.func @_kv_proj_kernel(%arg0: i32, %arg1: i32, %arg2: i32, %arg3: memref<1x64x32xf32, #tpu.memory_space<vmem>>, %arg4: memref<4x8x32xbf16, #tpu.memory_space<vmem>>, %arg5: memref<4x32x8xbf16, #tpu.memory_space<vmem>>, %arg6: memref<1x4x8x64xbf16, #tpu.memory_space<vmem>>, %arg7: memref<1x4x64x8xbf16, #tpu.memory_space<vmem>>) attributes {dimension_semantics = [#tpu.dimension_semantics<parallel>, #tpu.dimension_semantics<parallel>, #tpu.dimension_semantics<parallel>], iteration_bounds = array<i64: 1, 2, 1>, scalar_prefetch = 0 : i64, scratch_operands = 0 : i64, tpu.core_type = #tpu.core_type<tc>, window_params = [{transform_indices = @transform_0, window_bounds = array<i64: 1, 64, 32>}, {pipeline_mode = #tpu.pipeline_mode<synchronous>, transform_indices = @transform_1, window_bounds = array<i64: 4, 8, 32>}, {pipeline_mode = #tpu.pipeline_mode<synchronous>, transform_indices = @transform_2, window_bounds = array<i64: 4, 32, 8>}, {transform_indices = @transform_3, window_bounds = array<i64: 1, 4, 8, 64>}, {transform_indices = @transform_4, window_bounds = array<i64: 1, 4, 64, 8>}]} {
    %c0 = arith.constant 0 : index
    %c0_0 = arith.constant 0 : index
    %c0_1 = arith.constant 0 : index
    %0 = vector.load %arg3[%c0, %c0_0, %c0_1] : memref<1x64x32xf32, #tpu.memory_space<vmem>>, vector<1x64x32xf32>
    %1 = vector.shape_cast %0 : vector<1x64x32xf32> to vector<64x32xf32>
    %2 = arith.truncf %1 : vector<64x32xf32> to vector<64x32xbf16>
    %3 = tpu.transpose %1, [1, 0] : vector<64x32xf32> -> vector<32x64xf32>
    %4 = arith.truncf %3 : vector<32x64xf32> to vector<32x64xbf16>
    %c0_2 = arith.constant 0 : index
    %c0_3 = arith.constant 0 : index
    %c0_4 = arith.constant 0 : index
    %5 = vector.load %arg4[%c0_2, %c0_3, %c0_4] : memref<4x8x32xbf16, #tpu.memory_space<vmem>>, vector<1x8x32xbf16>
    %6 = vector.shape_cast %5 : vector<1x8x32xbf16> to vector<8x32xbf16>
    %cst = arith.constant dense<0.000000e+00> : vector<8x64xf32>
    %7 = tpu.matmul %6, %4, %cst {dimension_numbers = #tpu.dot_dimension_numbers<[1], [0], [0], [1], [0, 0, 1, 1], [], []>} : vector<8x32xbf16>, vector<32x64xbf16>, vector<8x64xf32> -> vector<8x64xf32>
    %8 = arith.truncf %7 : vector<8x64xf32> to vector<8x64xbf16>
    %c0_5 = arith.constant 0 : index
    %c0_6 = arith.constant 0 : index
    %c0_7 = arith.constant 0 : index
    %c0_8 = arith.constant 0 : index
    %9 = vector.load %arg6[%c0_5, %c0_6, %c0_7, %c0_8] : memref<1x4x8x64xbf16, #tpu.memory_space<vmem>>, vector<1x1x8x64xbf16>
    %10 = vector.shape_cast %9 : vector<1x1x8x64xbf16> to vector<8x64xbf16>
    %11 = vector.shape_cast %8 : vector<8x64xbf16> to vector<1x1x8x64xbf16>
    tpu.vector_store %arg6[%c0_5, %c0_6, %c0_7, %c0_8], %11 {strides = array<i32>} : memref<1x4x8x64xbf16, #tpu.memory_space<vmem>>, vector<1x1x8x64xbf16>,
    %c0_9 = arith.constant 0 : index
    %c0_10 = arith.constant 0 : index
    %c0_11 = arith.constant 0 : index
    %12 = vector.load %arg5[%c0_9, %c0_10, %c0_11] : memref<4x32x8xbf16, #tpu.memory_space<vmem>>, vector<1x32x8xbf16>
    %13 = vector.shape_cast %12 : vector<1x32x8xbf16> to vector<32x8xbf16>
    %cst_12 = arith.constant dense<0.000000e+00> : vector<64x8xf32>
    %14 = tpu.matmul %2, %13, %cst_12 {dimension_numbers = #tpu.dot_dimension_numbers<[1], [0], [0], [1], [0, 0, 1, 1], [], []>} : vector<64x32xbf16>, vector<32x8xbf16>, vector<64x8xf32> -> vector<64x8xf32>
    %15 = arith.truncf %14 : vector<64x8xf32> to vector<64x8xbf16>
    %c0_13 = arith.constant 0 : index
    %c0_14 = arith.constant 0 : index
    %c0_15 = arith.constant 0 : index
    %c0_16 = arith.constant 0 : index
    %16 = vector.load %arg7[%c0_13, %c0_14, %c0_15, %c0_16] : memref<1x4x64x8xbf16, #tpu.memory_space<vmem>>, vector<1x1x64x8xbf16>
    %17 = vector.shape_cast %16 : vector<1x1x64x8xbf16> to vector<64x8xbf16>
    %18 = vector.shape_cast %15 : vector<64x8xbf16> to vector<1x1x64x8xbf16>
    tpu.vector_store %arg7[%c0_13, %c0_14, %c0_15, %c0_16], %18 {strides = array<i32>} : memref<1x4x64x8xbf16, #tpu.memory_space<vmem>>, vector<1x1x64x8xbf16>,
    %c1 = arith.constant 1 : index
    %c0_17 = arith.constant 0 : index
    %c0_18 = arith.constant 0 : index
    %19 = vector.load %arg4[%c1, %c0_17, %c0_18] : memref<4x8x32xbf16, #tpu.memory_space<vmem>>, vector<1x8x32xbf16>
    %20 = vector.shape_cast %19 : vector<1x8x32xbf16> to vector<8x32xbf16>
    %cst_19 = arith.constant dense<0.000000e+00> : vector<8x64xf32>
    %21 = tpu.matmul %20, %4, %cst_19 {dimension_numbers = #tpu.dot_dimension_numbers<[1], [0], [0], [1], [0, 0, 1, 1], [], []>} : vector<8x32xbf16>, vector<32x64xbf16>, vector<8x64xf32> -> vector<8x64xf32>
    %22 = arith.truncf %21 : vector<8x64xf32> to vector<8x64xbf16>
    %c0_20 = arith.constant 0 : index
    %c1_21 = arith.constant 1 : index
    %c0_22 = arith.constant 0 : index
    %c0_23 = arith.constant 0 : index
    %23 = vector.load %arg6[%c0_20, %c1_21, %c0_22, %c0_23] : memref<1x4x8x64xbf16, #tpu.memory_space<vmem>>, vector<1x1x8x64xbf16>
    %24 = vector.shape_cast %23 : vector<1x1x8x64xbf16> to vector<8x64xbf16>
    %25 = vector.shape_cast %22 : vector<8x64xbf16> to vector<1x1x8x64xbf16>
    tpu.vector_store %arg6[%c0_20, %c1_21, %c0_22, %c0_23], %25 {strides = array<i32>} : memref<1x4x8x64xbf16, #tpu.memory_space<vmem>>, vector<1x1x8x64xbf16>,
    %c1_24 = arith.constant 1 : index
    %c0_25 = arith.constant 0 : index
    %c0_26 = arith.constant 0 : index
    %26 = vector.load %arg5[%c1_24, %c0_25, %c0_26] : memref<4x32x8xbf16, #tpu.memory_space<vmem>>, vector<1x32x8xbf16>
    %27 = vector.shape_cast %26 : vector<1x32x8xbf16> to vector<32x8xbf16>
    %cst_27 = arith.constant dense<0.000000e+00> : vector<64x8xf32>
    %28 = tpu.matmul %2, %27, %cst_27 {dimension_numbers = #tpu.dot_dimension_numbers<[1], [0], [0], [1], [0, 0, 1, 1], [], []>} : vector<64x32xbf16>, vector<32x8xbf16>, vector<64x8xf32> -> vector<64x8xf32>
    %29 = arith.truncf %28 : vector<64x8xf32> to vector<64x8xbf16>
    %c0_28 = arith.constant 0 : index
    %c1_29 = arith.constant 1 : index
    %c0_30 = arith.constant 0 : index
    %c0_31 = arith.constant 0 : index
    %30 = vector.load %arg7[%c0_28, %c1_29, %c0_30, %c0_31] : memref<1x4x64x8xbf16, #tpu.memory_space<vmem>>, vector<1x1x64x8xbf16>
    %31 = vector.shape_cast %30 : vector<1x1x64x8xbf16> to vector<64x8xbf16>
    %32 = vector.shape_cast %29 : vector<64x8xbf16> to vector<1x1x64x8xbf16>
    tpu.vector_store %arg7[%c0_28, %c1_29, %c0_30, %c0_31], %32 {strides = array<i32>} : memref<1x4x64x8xbf16, #tpu.memory_space<vmem>>, vector<1x1x64x8xbf16>,
    %c2 = arith.constant 2 : index
    %c0_32 = arith.constant 0 : index
    %c0_33 = arith.constant 0 : index
    %33 = vector.load %arg4[%c2, %c0_32, %c0_33] : memref<4x8x32xbf16, #tpu.memory_space<vmem>>, vector<1x8x32xbf16>
    %34 = vector.shape_cast %33 : vector<1x8x32xbf16> to vector<8x32xbf16>
    %cst_34 = arith.constant dense<0.000000e+00> : vector<8x64xf32>
    %35 = tpu.matmul %34, %4, %cst_34 {dimension_numbers = #tpu.dot_dimension_numbers<[1], [0], [0], [1], [0, 0, 1, 1], [], []>} : vector<8x32xbf16>, vector<32x64xbf16>, vector<8x64xf32> -> vector<8x64xf32>
    %36 = arith.truncf %35 : vector<8x64xf32> to vector<8x64xbf16>
    %c0_35 = arith.constant 0 : index
    %c2_36 = arith.constant 2 : index
    %c0_37 = arith.constant 0 : index
    %c0_38 = arith.constant 0 : index
    %37 = vector.load %arg6[%c0_35, %c2_36, %c0_37, %c0_38] : memref<1x4x8x64xbf16, #tpu.memory_space<vmem>>, vector<1x1x8x64xbf16>
    %38 = vector.shape_cast %37 : vector<1x1x8x64xbf16> to vector<8x64xbf16>
    %39 = vector.shape_cast %36 : vector<8x64xbf16> to vector<1x1x8x64xbf16>
    tpu.vector_store %arg6[%c0_35, %c2_36, %c0_37, %c0_38], %39 {strides = array<i32>} : memref<1x4x8x64xbf16, #tpu.memory_space<vmem>>, vector<1x1x8x64xbf16>,
    %c2_39 = arith.constant 2 : index
    %c0_40 = arith.constant 0 : index
    %c0_41 = arith.constant 0 : index
    %40 = vector.load %arg5[%c2_39, %c0_40, %c0_41] : memref<4x32x8xbf16, #tpu.memory_space<vmem>>, vector<1x32x8xbf16>
    %41 = vector.shape_cast %40 : vector<1x32x8xbf16> to vector<32x8xbf16>
    %cst_42 = arith.constant dense<0.000000e+00> : vector<64x8xf32>
    %42 = tpu.matmul %2, %41, %cst_42 {dimension_numbers = #tpu.dot_dimension_numbers<[1], [0], [0], [1], [0, 0, 1, 1], [], []>} : vector<64x32xbf16>, vector<32x8xbf16>, vector<64x8xf32> -> vector<64x8xf32>
    %43 = arith.truncf %42 : vector<64x8xf32> to vector<64x8xbf16>
    %c0_43 = arith.constant 0 : index
    %c2_44 = arith.constant 2 : index
    %c0_45 = arith.constant 0 : index
    %c0_46 = arith.constant 0 : index
    %44 = vector.load %arg7[%c0_43, %c2_44, %c0_45, %c0_46] : memref<1x4x64x8xbf16, #tpu.memory_space<vmem>>, vector<1x1x64x8xbf16>
    %45 = vector.shape_cast %44 : vector<1x1x64x8xbf16> to vector<64x8xbf16>
    %46 = vector.shape_cast %43 : vector<64x8xbf16> to vector<1x1x64x8xbf16>
    tpu.vector_store %arg7[%c0_43, %c2_44, %c0_45, %c0_46], %46 {strides = array<i32>} : memref<1x4x64x8xbf16, #tpu.memory_space<vmem>>, vector<1x1x64x8xbf16>,
    %c3 = arith.constant 3 : index
    %c0_47 = arith.constant 0 : index
    %c0_48 = arith.constant 0 : index
    %47 = vector.load %arg4[%c3, %c0_47, %c0_48] : memref<4x8x32xbf16, #tpu.memory_space<vmem>>, vector<1x8x32xbf16>
    %48 = vector.shape_cast %47 : vector<1x8x32xbf16> to vector<8x32xbf16>
    %cst_49 = arith.constant dense<0.000000e+00> : vector<8x64xf32>
    %49 = tpu.matmul %48, %4, %cst_49 {dimension_numbers = #tpu.dot_dimension_numbers<[1], [0], [0], [1], [0, 0, 1, 1], [], []>} : vector<8x32xbf16>, vector<32x64xbf16>, vector<8x64xf32> -> vector<8x64xf32>
    %50 = arith.truncf %49 : vector<8x64xf32> to vector<8x64xbf16>
    %c0_50 = arith.constant 0 : index
    %c3_51 = arith.constant 3 : index
    %c0_52 = arith.constant 0 : index
    %c0_53 = arith.constant 0 : index
    %51 = vector.load %arg6[%c0_50, %c3_51, %c0_52, %c0_53] : memref<1x4x8x64xbf16, #tpu.memory_space<vmem>>, vector<1x1x8x64xbf16>
    %52 = vector.shape_cast %51 : vector<1x1x8x64xbf16> to vector<8x64xbf16>
    %53 = vector.shape_cast %50 : vector<8x64xbf16> to vector<1x1x8x64xbf16>
    tpu.vector_store %arg6[%c0_50, %c3_51, %c0_52, %c0_53], %53 {strides = array<i32>} : memref<1x4x8x64xbf16, #tpu.memory_space<vmem>>, vector<1x1x8x64xbf16>,
    %c3_54 = arith.constant 3 : index
    %c0_55 = arith.constant 0 : index
    %c0_56 = arith.constant 0 : index
    %54 = vector.load %arg5[%c3_54, %c0_55, %c0_56] : memref<4x32x8xbf16, #tpu.memory_space<vmem>>, vector<1x32x8xbf16>
    %55 = vector.shape_cast %54 : vector<1x32x8xbf16> to vector<32x8xbf16>
    %cst_57 = arith.constant dense<0.000000e+00> : vector<64x8xf32>
    %56 = tpu.matmul %2, %55, %cst_57 {dimension_numbers = #tpu.dot_dimension_numbers<[1], [0], [0], [1], [0, 0, 1, 1], [], []>} : vector<64x32xbf16>, vector<32x8xbf16>, vector<64x8xf32> -> vector<64x8xf32>
    %57 = arith.truncf %56 : vector<64x8xf32> to vector<64x8xbf16>
    %c0_58 = arith.constant 0 : index
    %c3_59 = arith.constant 3 : index
    %c0_60 = arith.constant 0 : index
    %c0_61 = arith.constant 0 : index
    %58 = vector.load %arg7[%c0_58, %c3_59, %c0_60, %c0_61] : memref<1x4x64x8xbf16, #tpu.memory_space<vmem>>, vector<1x1x64x8xbf16>
    %59 = vector.shape_cast %58 : vector<1x1x64x8xbf16> to vector<64x8xbf16>
    %60 = vector.shape_cast %57 : vector<64x8xbf16> to vector<1x1x64x8xbf16>
    tpu.vector_store %arg7[%c0_58, %c3_59, %c0_60, %c0_61], %60 {strides = array<i32>} : memref<1x4x64x8xbf16, #tpu.memory_space<vmem>>, vector<1x1x64x8xbf16>,
    return
  }
  func.func @transform_0(%arg0: i32, %arg1: i32, %arg2: i32) -> (i32, i32, i32) {
    %c0_i32 = arith.constant 0 : i32
    %c0_i32_0 = arith.constant 0 : i32
    return %arg1, %arg2, %c0_i32 : i32, i32, i32
  }
  func.func @transform_1(%arg0: i32, %arg1: i32, %arg2: i32) -> (i32, i32, i32) {
    %c0_i32 = arith.constant 0 : i32
    %c0_i32_0 = arith.constant 0 : i32
    %c0_i32_1 = arith.constant 0 : i32
    return %arg0, %c0_i32, %c0_i32_0 : i32, i32, i32
  }
  func.func @transform_2(%arg0: i32, %arg1: i32, %arg2: i32) -> (i32, i32, i32) {
    %c0_i32 = arith.constant 0 : i32
    %c0_i32_0 = arith.constant 0 : i32
    %c0_i32_1 = arith.constant 0 : i32
    return %arg0, %c0_i32, %c0_i32_0 : i32, i32, i32
  }
  func.func @transform_3(%arg0: i32, %arg1: i32, %arg2: i32) -> (i32, i32, i32, i32) {
    %c0_i32 = arith.constant 0 : i32
    %c0_i32_0 = arith.constant 0 : i32
    return %arg1, %arg0, %c0_i32, %arg2 : i32, i32, i32, i32
  }
  func.func @transform_4(%arg0: i32, %arg1: i32, %arg2: i32) -> (i32, i32, i32, i32) {
    %c0_i32 = arith.constant 0 : i32
    %c0_i32_0 = arith.constant 0 : i32
    return %arg1, %arg0, %arg2, %c0_i32 : i32, i32, i32, i32
  }
}

</mosaic_0001>

<llo_original>
// kernel: tpu_custom_call.1
$region0: #{tpu_custom_call.1}
  #allocation0 [shape = 'u32[]', space=smem, size = 0x4, offset = 0x4, fixed_abs, tag = 'smem constant byte address 0x4 - core index']
  #allocation1 [shape = 'u32[144,128]{1,0:T(1,128)}', space=vmem, size = 0x12000, scoped, tag = 'internal scratch']
  %s0 = inlined_call_operand.vmem [shape: f32[2,64,32], index: 0, kind: input, shape index: {}]
  %s1 = inlined_call_operand.vmem [shape: bf16[4,8,32], index: 1, kind: input, shape index: {}]
  %s2 = inlined_call_operand.vmem [shape: bf16[4,32,8], index: 2, kind: input, shape index: {}]
  %s3 = inlined_call_operand.hbm [shape: bf16[2,4,8,64], index: 3, kind: output, shape index: {0}]
  %s4 = inlined_call_operand.vmem [shape: bf16[2,4,64,8], index: 4, kind: output, shape index: {1}]
  %5 = xla_tuple %s3, %s4
  %s6 = sld [smem:[#allocation0]]
  $region53: #{tpu_custom_call.1} parent=0
    _
  %s8 = ssub.s32 1, %s6
  %s9 = scalar_select 0, %s8, %s6
  $region1: #{tpu_custom_call.1} parent=0
    #allocation2 [shape = 'u8[16384]{0}', space=vmem, size = 0x4000, scoped, tag = 'output window, operand 0']
    #allocation3 [shape = 's32[2]{0}', space=sflag, size = 0x8, scoped, tag = 'scoped memory for tpu_custom_call.1']
    %10 = vsyncpa [#allocation3], 0
    %s11 = scalar_lea.sflag [#allocation3], 1
    %12 = vsyncpa %s11, 0
    loop: start=0, step=1, limit=4
    $region2: #{tpu_custom_call.1} parent=1 // loop_pre_header
      _
    $region3: #{tpu_custom_call.1} parent=1 // loop_header
      %s14 = sphi 0, %s18
      %p15 = scmp.ge.s32.totalorder %s14, 4
      %s21 = sphi 0, %s40
      %s22 = sphi 0, %s36
      %s23 = sphi 0, %s32
      %s24 = sphi 0, %s21
      %s25 = sphi 0, %s22
      %s26 = sphi 0, %s23
      %s27 = sphi 0, %s24
      %s28 = sphi 0, %s25
      %s29 = sphi 0, %s26
      %s45 = sphi 0, %s47
      %s48 = sphi 0, %s45
      %s49 = sphi 0, %s48
      %s65 = sphi 0, %s49
      %s71 = sphi 0, %s73
      %s74 = sphi 0, %s71
      %s75 = sphi 0, %s74
      %s91 = sphi 0, %s75
      %s97 = sphi 0, %s99
      %s100 = sphi 0, %s97
      %s101 = sphi 0, %s100
      %s117 = sphi 0, %s101
      %s127 = sphi 0, %s129
      %s130 = sphi 0, %s127
      %s131 = sphi 0, %s130
      %s147 = sphi 0, %s131
      %s157 = sphi 0, %s159
      %s160 = sphi 0, %s157
      %s161 = sphi 0, %s160
      %s177 = sphi 0, %s161
    $region4: #{tpu_custom_call.1} parent=1 // loop_header_branch
      %17 = sbr.rel (%p15) target = $region8
    $region5: #{tpu_custom_call.1} parent=1 // loop_body
      %s19 = ssub.s32 %s14, 1
      %s20 = ssub.s32 %s14, 2
      %s30 = sadd.s32 1, %s23
      %p31 = scmp.ge.s32.totalorder %s30, 1
      %s32 = scalar_select %p31, 0, %s30
      %s33 = sadd.s32 1, %s22
      %s34 = scalar_select %p31, %s33, %s22
      %p35 = scmp.ge.s32.totalorder %s34, 2
      %s36 = scalar_select %p35, 0, %s34
      %s37 = sadd.s32 1, %s21
      %s38 = scalar_select %p35, %s37, %s21
      %p39 = scmp.ge.s32.totalorder %s38, 1
      %s40 = scalar_select %p39, 0, %s38
      %s41 = ssub.s32 %s22, %s36
      %s42 = ssub.s32 %s23, %s32
      %s43 = sor.u32 %s41, %s42
      %p44 = scmp.eq.s32.totalorder %s43, 0
      %s46 = sadd.s32 %s45, 1
      %s47 = scalar_select %p44, %s45, %s46
      %p50 = pneg %p44
      %p51 = scmp.eq.s32.totalorder %s14, 1
      %p52 = por %p50, %p51
      %p53 = scmp.ne.s32.totalorder %s45, %s48
      %p54 = scmp.eq.s32.totalorder %s14, 0
      %p55 = por %p53, %p54
      %p56 = scmp.ne.s32.totalorder %s45, %s48
      %p57 = scmp.eq.s32.totalorder %s19, 1
      %p58 = por %p56, %p57
      %p59 = scmp.ne.s32.totalorder %s48, %s49
      %p60 = scmp.eq.s32.totalorder %s19, 0
      %p61 = por %p59, %p60
      %p62 = scmp.ne.s32.totalorder %s48, %s49
      %p63 = scmp.eq.s32.totalorder %s20, 1
      %p64 = por %p62, %p63
      %p66 = scmp.ne.s32.totalorder %s49, %s65
      %p67 = scmp.eq.s32.totalorder %s20, 0
      %p68 = por %p66, %p67
      %s69 = ssub.s32 %s21, %s40
      %p70 = scmp.eq.s32.totalorder %s69, 0
      %s72 = sadd.s32 %s71, 1
      %s73 = scalar_select %p70, %s71, %s72
      %p76 = pneg %p70
      %p77 = scmp.eq.s32.totalorder %s14, 1
      %p78 = por %p76, %p77
      %p79 = scmp.ne.s32.totalorder %s71, %s74
      %p80 = scmp.eq.s32.totalorder %s14, 0
      %p81 = por %p79, %p80
      %p82 = scmp.ne.s32.totalorder %s71, %s74
      %p83 = scmp.eq.s32.totalorder %s19, 1
      %p84 = por %p82, %p83
      %p85 = scmp.ne.s32.totalorder %s74, %s75
      %p86 = scmp.eq.s32.totalorder %s19, 0
      %p87 = por %p85, %p86
      %p88 = scmp.ne.s32.totalorder %s74, %s75
      %p89 = scmp.eq.s32.totalorder %s20, 1
      %p90 = por %p88, %p89
      %p92 = scmp.ne.s32.totalorder %s75, %s91
      %p93 = scmp.eq.s32.totalorder %s20, 0
      %p94 = por %p92, %p93
      %s95 = ssub.s32 %s21, %s40
      %p96 = scmp.eq.s32.totalorder %s95, 0
      %s98 = sadd.s32 %s97, 1
      %s99 = scalar_select %p96, %s97, %s98
      %p102 = pneg %p96
      %p103 = scmp.eq.s32.totalorder %s14, 1
      %p104 = por %p102, %p103
      %p105 = scmp.ne.s32.totalorder %s97, %s100
      %p106 = scmp.eq.s32.totalorder %s14, 0
      %p107 = por %p105, %p106
      %p108 = scmp.ne.s32.totalorder %s97, %s100
      %p109 = scmp.eq.s32.totalorder %s19, 1
      %p110 = por %p108, %p109
      %p111 = scmp.ne.s32.totalorder %s100, %s101
      %p112 = scmp.eq.s32.totalorder %s19, 0
      %p113 = por %p111, %p112
      %p114 = scmp.ne.s32.totalorder %s100, %s101
      %p115 = scmp.eq.s32.totalorder %s20, 1
      %p116 = por %p114, %p115
      %p118 = scmp.ne.s32.totalorder %s101, %s117
      %p119 = scmp.eq.s32.totalorder %s20, 0
      %p120 = por %p118, %p119
      %s121 = ssub.s32 %s22, %s36
      %s122 = ssub.s32 %s21, %s40
      %s123 = sor.u32 %s121, %s122
      %s124 = ssub.s32 %s23, %s32
      %s125 = sor.u32 %s123, %s124
      %p126 = scmp.eq.s32.totalorder %s125, 0
      %s128 = sadd.s32 %s127, 1
      %s129 = scalar_select %p126, %s127, %s128
      %p132 = pneg %p126
      %p133 = scmp.eq.s32.totalorder %s14, 1
      %p134 = por %p132, %p133
      %p135 = scmp.ne.s32.totalorder %s127, %s130
      %p136 = scmp.eq.s32.totalorder %s14, 0
      %p137 = por %p135, %p136
      %p138 = scmp.ne.s32.totalorder %s127, %s130
      %p139 = scmp.eq.s32.totalorder %s19, 1
      %p140 = por %p138, %p139
      %p141 = scmp.ne.s32.totalorder %s130, %s131
      %p142 = scmp.eq.s32.totalorder %s19, 0
      %p143 = por %p141, %p142
      %p144 = scmp.ne.s32.totalorder %s130, %s131
      %p145 = scmp.eq.s32.totalorder %s20, 1
      %p146 = por %p144, %p145
      %p148 = scmp.ne.s32.totalorder %s131, %s147
      %p149 = scmp.eq.s32.totalorder %s20, 0
      %p150 = por %p148, %p149
      %s151 = ssub.s32 %s22, %s36
      %s152 = ssub.s32 %s21, %s40
      %s153 = sor.u32 %s151, %s152
      %s154 = ssub.s32 %s23, %s32
      %s155 = sor.u32 %s153, %s154
      %p156 = scmp.eq.s32.totalorder %s155, 0
      %s158 = sadd.s32 %s157, 1
      %s159 = scalar_select %p156, %s157, %s158
      %p162 = pneg %p156
      %p163 = scmp.eq.s32.totalorder %s14, 1
      %p164 = por %p162, %p163
      %p165 = scmp.ne.s32.totalorder %s157, %s160
      %p166 = scmp.eq.s32.totalorder %s14, 0
      %p167 = por %p165, %p166
      %p168 = scmp.ne.s32.totalorder %s157, %s160
      %p169 = scmp.eq.s32.totalorder %s19, 1
      %p170 = por %p168, %p169
      %p171 = scmp.ne.s32.totalorder %s160, %s161
      %p172 = scmp.eq.s32.totalorder %s19, 0
      %p173 = por %p171, %p172
      %p174 = scmp.ne.s32.totalorder %s160, %s161
      %p175 = scmp.eq.s32.totalorder %s20, 1
      %p176 = por %p174, %p175
      %p178 = scmp.ne.s32.totalorder %s161, %s177
      %p179 = scmp.eq.s32.totalorder %s20, 0
      %p180 = por %p178, %p179
      %p181 = scmp.le.s32.totalorder 1, %s14
      %p182 = scmp.lt.s32.totalorder %s14, 3
      %p183 = pnand %p181, %p182
      %p184 = pneg %p183
      // Predicated region
      $region9: #{tpu_custom_call.1} parent=5 // pred_check
        _
      $region10: #{tpu_custom_call.1} parent=5 // pred_check_branch
        %186 = sbr.rel (%p183) target = $region12
      $region11: #{tpu_custom_call.1} parent=5 // pred_region
        %s187 = ssub.s32 %s14, 1
        // Predicated region
        $region13: #{tpu_custom_call.1} parent=11 // pred_check
          %p188 = pneg %p87
        $region14: #{tpu_custom_call.1} parent=11 // pred_check_branch
          %190 = sbr.rel (%p188) target = $region16
        $region15: #{tpu_custom_call.1} parent=11 // pred_region
          %s191 = smul.u32 4, %s24
          %p192 = scmp.lt.s32.totalorder %s191, 3
          %s193 = scalar_select %p192, %s191, 3
          %s194 = smul.addr %s193, 4
          %s195 = scalar_lea.vmem %s1, %s194
          %s196 = smul.u32 4, %s24
        $region16: #{tpu_custom_call.1} parent=11 // pred_fallthru
          _
        // Predicated region
        $region17: #{tpu_custom_call.1} parent=11 // pred_check
          %p197 = pneg %p113
        $region18: #{tpu_custom_call.1} parent=11 // pred_check_branch
          %199 = sbr.rel (%p197) target = $region20
        $region19: #{tpu_custom_call.1} parent=11 // pred_region
          %s200 = smul.u32 4, %s24
          %p201 = scmp.lt.s32.totalorder %s200, 3
          %s202 = scalar_select %p201, %s200, 3
          %s203 = smul.addr %s202, 4
          %s204 = smul.addr %s203, 4
          %s205 = scalar_lea.vmem %s2, %s204
          %s206 = smul.u32 4, %s24
        $region20: #{tpu_custom_call.1} parent=11 // pred_fallthru
          _
      $region12: #{tpu_custom_call.1} parent=5 // pred_fallthru
        _
      %p207 = scmp.lt.s32.totalorder %s14, 2
      // Predicated region
      $region21: #{tpu_custom_call.1} parent=5 // pred_check
        %p208 = pneg %p207
      $region22: #{tpu_custom_call.1} parent=5 // pred_check_branch
        %210 = sbr.rel (%p208) target = $region24
      $region23: #{tpu_custom_call.1} parent=5 // pred_region
        // Predicated region
        $region25: #{tpu_custom_call.1} parent=23 // pred_check
          %p211 = pneg %p55
        $region26: #{tpu_custom_call.1} parent=23 // pred_check_branch
          %213 = sbr.rel (%p211) target = $region28
        $region27: #{tpu_custom_call.1} parent=23 // pred_region
          %s214 = smul.u32 8, %s23
          %p215 = scmp.lt.s32.totalorder %s22, 1
          %s216 = scalar_select %p215, %s22, 1
          %p217 = scmp.lt.s32.totalorder %s214, 7
          %s218 = scalar_select %p217, %s214, 7
          %s219 = smul.addr %s216, 8
          %s220 = sadd.s32 %s218, %s219
          %s221 = smul.addr %s220, 8
          %s222 = scalar_lea.vmem %s0, %s221
          %s223 = smul.u32 8, %s23
        $region28: #{tpu_custom_call.1} parent=23 // pred_fallthru
          _
      $region24: #{tpu_custom_call.1} parent=5 // pred_fallthru
        _
      %p224 = scmp.le.s32.totalorder 1, %s14
      %p225 = scmp.lt.s32.totalorder %s14, 3
      %p226 = pnand %p224, %p225
      %p227 = pneg %p226
      // Predicated region
      $region29: #{tpu_custom_call.1} parent=5 // pred_check
        _
      $region30: #{tpu_custom_call.1} parent=5 // pred_check_branch
        %229 = sbr.rel (%p226) target = $region32
      $region31: #{tpu_custom_call.1} parent=5 // pred_region
        %s230 = ssub.s32 %s14, 1
        %s231 = smul.u32 8, %s26
        %p232 = scmp.lt.s32.totalorder %s25, 1
        %s233 = scalar_select %p232, %s25, 1
        %p234 = scmp.lt.s32.totalorder %s231, 7
        %s235 = scalar_select %p234, %s231, 7
        %s236 = smul.addr %s233, 8
        %s237 = sadd.s32 %s235, %s236
        %s238 = smul.addr %s237, 8
        %s239 = scalar_lea.vmem %s0, %s238
        %p240 = pneg %p61
        %p241 = pneg %p58
        %s242 = smul.u32 4, %s24
        %p243 = scmp.lt.s32.totalorder %s242, 3
        %s244 = scalar_select %p243, %s242, 3
        %s245 = smul.addr %s244, 4
        %s246 = scalar_lea.vmem %s1, %s245
        %p247 = pneg %p87
        %p248 = pneg %p84
        %s249 = smul.u32 4, %s24
        %p250 = scmp.lt.s32.totalorder %s249, 3
        %s251 = scalar_select %p250, %s249, 3
        %s252 = smul.addr %s251, 4
        %s253 = smul.addr %s252, 4
        %s254 = scalar_lea.vmem %s2, %s253
        %p255 = pneg %p113
        %p256 = pneg %p110
        %p257 = pneg %p143
        %p258 = pneg %p140
        %s259 = sand.u32 %s130, 1
        %s260 = scalar_lea.sflag [#allocation3], %s259
        %s261 = sand.u32 %s130, 1
        %s262 = smul.addr %s261, 16
        %s263 = scalar_lea.vmem [#allocation2], %s262
        %p264 = pneg %p173
        %p265 = pneg %p170
        %s266 = smul.u32 4, %s24
        %s267 = smul.u32 8, %s26
        %p268 = scmp.lt.s32.totalorder %s25, 1
        %s269 = scalar_select %p268, %s25, 1
        %p270 = scmp.lt.s32.totalorder %s266, 3
        %s271 = scalar_select %p270, %s266, 3
        %p272 = scmp.lt.s32.totalorder %s267, 7
        %s273 = scalar_select %p272, %s267, 7
        %s274 = smul.addr %s271, 8
        %s275 = sadd.s32 %s273, %s274
        %s276 = smul.addr %s269, 32
        %s277 = sadd.s32 %s275, %s276
        %s278 = smul.addr %s277, 4
        %s279 = scalar_lea.vmem %s4, %s278
        %s280 = smul.u32 8, %s26
        %p281 = scmp.lt.s32.totalorder %s25, 1
        %s282 = scalar_select %p281, %s25, 1
        %p283 = scmp.lt.s32.totalorder %s280, 7
        %s284 = scalar_select %p283, %s280, 7
        %s285 = smul.addr %s282, 8
        %s286 = sadd.s32 %s284, %s285
        %s287 = smul.addr %s286, 8
        %s288 = scalar_lea.vmem %s0, %s287
        %s289 = smul.u32 8, %s26
        %s290 = smul.u32 4, %s24
        %p291 = scmp.lt.s32.totalorder %s290, 3
        %s292 = scalar_select %p291, %s290, 3
        %s293 = smul.addr %s292, 4
        %s294 = scalar_lea.vmem %s1, %s293
        %s295 = smul.u32 4, %s24
        %s296 = smul.u32 4, %s24
        %p297 = scmp.lt.s32.totalorder %s296, 3
        %s298 = scalar_select %p297, %s296, 3
        %s299 = smul.addr %s298, 4
        %s300 = smul.addr %s299, 4
        %s301 = scalar_lea.vmem %s2, %s300
        %s302 = smul.u32 4, %s24
        %s303 = smul.u32 4, %s24
        %s304 = smul.u32 4, %s24
        %s305 = smul.u32 8, %s26
        %p306 = scmp.lt.s32.totalorder %s25, 1
        %s307 = scalar_select %p306, %s25, 1
        %p308 = scmp.lt.s32.totalorder %s304, 3
        %s309 = scalar_select %p308, %s304, 3
        %p310 = scmp.lt.s32.totalorder %s305, 7
        %s311 = scalar_select %p310, %s305, 7
        %s312 = smul.addr %s309, 8
        %s313 = sadd.s32 %s311, %s312
        %s314 = smul.addr %s307, 32
        %s315 = sadd.s32 %s313, %s314
        %s316 = smul.addr %s315, 4
        %s317 = scalar_lea.vmem %s4, %s316
        %s318 = smul.u32 4, %s24
        %s319 = smul.u32 8, %s26
        %v321 = vld [vmem:[%s288] sm:$0xff]
        %v322 = vld [vmem:[%s288 + $0x8] sm:$0xff]
        %v323 = vld [vmem:[%s288 + $0x10] sm:$0xff]
        %v324 = vld [vmem:[%s288 + $0x18] sm:$0xff]
        %v325 = vld [vmem:[%s288 + $0x20] sm:$0xff]
        %v326 = vld [vmem:[%s288 + $0x28] sm:$0xff]
        %v327 = vld [vmem:[%s288 + $0x30] sm:$0xff]
        %v328 = vld [vmem:[%s288 + $0x38] sm:$0xff]
        %v329 = vpack.c.bf16 %v322, %v321
        %v330 = vpack.c.bf16 %v324, %v323
        %v331 = vpack.c.bf16 %v326, %v325
        %v332 = vpack.c.bf16 %v328, %v327
        %333 = vxpose.xlu0.b32.start [1/16] %v321, 128
        %334 = vxpose.xlu0.b32.cont [2/16] %v322, 128
        %335 = vxpose.xlu0.b32.cont [3/16] %v323, 128
        %336 = vxpose.xlu0.b32.cont [4/16] %v324, 128
        %337 = vxpose.xlu0.b32.cont [5/16] %v325, 128
        %338 = vxpose.xlu0.b32.cont [6/16] %v326, 128
        %339 = vxpose.xlu0.b32.cont [7/16] %v327, 128
        %340 = vxpose.xlu0.b32.cont [8/16] %v328, 128
        %341 = vxpose.xlu0.b32.cont [9/16] 0.0, 128
        %342 = vxpose.xlu0.b32.cont [10/16] 0.0, 128
        %343 = vxpose.xlu0.b32.cont [11/16] 0.0, 128
        %344 = vxpose.xlu0.b32.cont [12/16] 0.0, 128
        %345 = vxpose.xlu0.b32.cont [13/16] 0.0, 128
        %346 = vxpose.xlu0.b32.cont [14/16] 0.0, 128
        %347 = vxpose.xlu0.b32.cont [15/16] 0.0, 128
        %348 = vxpose.xlu0.b32.end [16/16] 0.0, 128
        %v349 = vpop.trf.xlu0
        %v350 = vpop.trf.xlu0
        %v351 = vpop.trf.xlu0
        %v352 = vpop.trf.xlu0
        %v353 = vpop.trf.xlu0
        %v354 = vpop.trf.xlu0
        %v355 = vpop.trf.xlu0
        %v356 = vpop.trf.xlu0
        %v357 = vpop.trf.xlu0
        %v358 = vpop.trf.xlu0
        %v359 = vpop.trf.xlu0
        %v360 = vpop.trf.xlu0
        %v361 = vpop.trf.xlu0
        %v362 = vpop.trf.xlu0
        %v363 = vpop.trf.xlu0
        %v364 = vpop.trf.xlu0
        %v365 = vpack.c.bf16 %v350, %v349
        %v366 = vpack.c.bf16 %v352, %v351
        %v367 = vld [vmem:[%s294] sm:$0xf]
        %vm368 = vcmask 261120
        %v370 = vsel %vm368, %v367, 0
        %372 = vmatprep.subr.bf16.mxu0 0
        %373 = vmatpush1.bf16.msra.mxu0 0
        %374 = vmatprep.subr.bf16.mxu0 0
        %375 = vmatpush1.bf16.msra.mxu0 0
        %376 = vmatprep.subr.bf16.mxu0 0
        %377 = vmatpush1.bf16.msra.mxu0 0
        %378 = vmatprep.subr.bf16.mxu0 0
        %379 = vmatpush1.bf16.msra.mxu0 0
        %380 = vmatprep.subr.bf16.mxu0 0
        %381 = vmatpush1.bf16.msra.mxu0 0
        %382 = vmatprep.subr.bf16.mxu0 0
        %383 = vmatpush1.bf16.msra.mxu0 0
        %384 = vmatprep.subr.bf16.mxu0 0
        %385 = vmatpush1.bf16.msra.mxu0 %v366
        %386 = vmatprep.subr.bf16.mxu0 0
        %387 = vmatpush1.bf16.msra.mxu0 %v365
        %388 = vmatprep.subr.bf16.mxu0 0
        %389 = vmatpush2.bf16.msra.mxu0 0
        %390 = vmatprep.subr.bf16.mxu0 0
        %391 = vmatpush2.bf16.msra.mxu0 0
        %392 = vmatprep.subr.bf16.mxu0 0
        %393 = vmatpush2.bf16.msra.mxu0 0
        %394 = vmatprep.subr.bf16.mxu0 0
        %395 = vmatpush2.bf16.msra.mxu0 0
        %396 = vmatprep.subr.bf16.mxu0 0
        %397 = vmatpush2.bf16.msra.mxu0 0
        %398 = vmatprep.subr.bf16.mxu0 0
        %399 = vmatpush2.bf16.msra.mxu0 0
        %400 = vmatprep.subr.bf16.mxu0 0
        %401 = vmatpush2.bf16.msra.mxu0 0
        %402 = vmatprep.subr.bf16.mxu0 0
        %403 = vmatpush2.bf16.msra.mxu0 0
        %404 = vmatprep.mubr.bf16.mxu0 0
        %405 = vmatmul.mubr.bf16.gmra.mxu0 %v370
        %v406 = vpop.f32.mrf.mxu0
        %v407 = vadd.f32 0.0, %v406
        %v408 = vpop.f32.mrf.mxu0
        %v409 = vpop.f32.mrf.mxu0
        %v410 = vpop.f32.mrf.mxu0
        %411 = vdwg.mxu0
        %v412 = vpack.c.bf16 %v407, %v407
        %vm413 = vcmask 519168
        %414 = vst.msk [vmem:[%s263] sm:$0xf] %vm413, %v412
        %v415 = vld [vmem:[%s301] sm:$0xf]
        %v416 = vld [vmem:[%s301 + $0x4] sm:$0xf]
        %v417 = vld [vmem:[%s301 + $0x8] sm:$0xf]
        %v418 = vld [vmem:[%s301 + $0xc] sm:$0xf]
        %v423 = vunpack.c.l.b16 %v415
        %v424 = vunpack.c.l.b16 %v416
        %v425 = vunpack.c.l.b16 %v417
        %v426 = vunpack.c.l.b16 %v418
        %v427 = vpack.c.b16 %v424, %v423
        %v428 = vpack.c.b16 %v426, %v425
        %v432 = vsel %vm368, %v329, 0
        %v435 = vsel %vm368, %v330, 0
        %v438 = vsel %vm368, %v331, 0
        %v441 = vsel %vm368, %v332, 0
        %443 = vmatprep.subr.bf16.mxu0 0
        %444 = vmatpush1.bf16.msra.mxu0 0
        %445 = vmatprep.subr.bf16.mxu0 0
        %446 = vmatpush1.bf16.msra.mxu0 0
        %447 = vmatprep.subr.bf16.mxu0 0
        %448 = vmatpush1.bf16.msra.mxu0 0
        %449 = vmatprep.subr.bf16.mxu0 0
        %450 = vmatpush1.bf16.msra.mxu0 0
        %451 = vmatprep.subr.bf16.mxu0 0
        %452 = vmatpush1.bf16.msra.mxu0 0
        %453 = vmatprep.subr.bf16.mxu0 0
        %454 = vmatpush1.bf16.msra.mxu0 0
        %455 = vmatprep.subr.bf16.mxu0 0
        %456 = vmatpush1.bf16.msra.mxu0 %v428
        %457 = vmatprep.subr.bf16.mxu0 0
        %458 = vmatpush1.bf16.msra.mxu0 %v427
        %459 = vmatprep.subr.bf16.mxu0 0
        %460 = vmatpush2.bf16.msra.mxu0 0
        %461 = vmatprep.subr.bf16.mxu0 0
        %462 = vmatpush2.bf16.msra.mxu0 0
        %463 = vmatprep.subr.bf16.mxu0 0
        %464 = vmatpush2.bf16.msra.mxu0 0
        %465 = vmatprep.subr.bf16.mxu0 0
        %466 = vmatpush2.bf16.msra.mxu0 0
        %467 = vmatprep.subr.bf16.mxu0 0
        %468 = vmatpush2.bf16.msra.mxu0 0
        %469 = vmatprep.subr.bf16.mxu0 0
        %470 = vmatpush2.bf16.msra.mxu0 0
        %471 = vmatprep.subr.bf16.mxu0 0
        %472 = vmatpush2.bf16.msra.mxu0 0
        %473 = vmatprep.subr.bf16.mxu0 0
        %474 = vmatpush2.bf16.msra.mxu0 0
        %475 = vmatprep.mubr.bf16.mxu0 0
        %476 = vmatmul.mubr.bf16.gmra.mxu0 %v432
        %v477 = vpop.f32.mrf.mxu0
        %v478 = vadd.f32 0.0, %v477
        %v479 = vpop.f32.mrf.mxu0
        %v480 = vpop.f32.mrf.mxu0
        %v481 = vadd.f32 0.0, %v480
        %v482 = vpop.f32.mrf.mxu0
        %483 = vmatprep.mubr.bf16.mxu0 0
        %484 = vmatmul.mubr.bf16.gmra.mxu0 %v435
        %v485 = vpop.f32.mrf.mxu0
        %v486 = vadd.f32 0.0, %v485
        %v487 = vpop.f32.mrf.mxu0
        %v488 = vpop.f32.mrf.mxu0
        %v489 = vadd.f32 0.0, %v488
        %v490 = vpop.f32.mrf.mxu0
        %491 = vmatprep.mubr.bf16.mxu0 0
        %492 = vmatmul.mubr.bf16.gmra.mxu0 %v438
        %v493 = vpop.f32.mrf.mxu0
        %v494 = vadd.f32 0.0, %v493
        %v495 = vpop.f32.mrf.mxu0
        %v496 = vpop.f32.mrf.mxu0
        %v497 = vadd.f32 0.0, %v496
        %v498 = vpop.f32.mrf.mxu0
        %499 = vmatprep.mubr.bf16.mxu0 0
        %500 = vmatmul.mubr.bf16.gmra.mxu0 %v441
        %v501 = vpop.f32.mrf.mxu0
        %v502 = vadd.f32 0.0, %v501
        %v503 = vpop.f32.mrf.mxu0
        %v504 = vpop.f32.mrf.mxu0
        %v505 = vadd.f32 0.0, %v504
        %v506 = vpop.f32.mrf.mxu0
        %507 = vdwg.mxu0
        %v508 = vpack.c.bf16 %v481, %v478
        %v509 = vpack.c.bf16 %v489, %v486
        %v510 = vpack.c.bf16 %v497, %v494
        %v511 = vpack.c.bf16 %v505, %v502
        %v516 = vunpack.c.l.b16 %v508
        %v517 = vunpack.c.h.b16 %v508
        %v518 = vunpack.c.l.b16 %v509
        %v519 = vunpack.c.h.b16 %v509
        %v520 = vunpack.c.l.b16 %v510
        %v521 = vunpack.c.h.b16 %v510
        %v522 = vunpack.c.l.b16 %v511
        %v523 = vunpack.c.h.b16 %v511
        %v524 = vpack.c.b16 %v516, %v516
        %v525 = vpack.c.b16 %v517, %v517
        %v526 = vpack.c.b16 %v518, %v518
        %v527 = vpack.c.b16 %v519, %v519
        %v528 = vpack.c.b16 %v520, %v520
        %v529 = vpack.c.b16 %v521, %v521
        %v530 = vpack.c.b16 %v522, %v522
        %v531 = vpack.c.b16 %v523, %v523
        %vm540 = vcmask 60416
        %541 = vst.msk [vmem:[%s317] sm:$0xf] %vm540, %v524
        %542 = vst.msk [vmem:[%s317 + $0x4] sm:$0xf] %vm540, %v525
        %543 = vst.msk [vmem:[%s317 + $0x8] sm:$0xf] %vm540, %v526
        %544 = vst.msk [vmem:[%s317 + $0xc] sm:$0xf] %vm540, %v527
        %545 = vst.msk [vmem:[%s317 + $0x10] sm:$0xf] %vm540, %v528
        %546 = vst.msk [vmem:[%s317 + $0x14] sm:$0xf] %vm540, %v529
        %547 = vst.msk [vmem:[%s317 + $0x18] sm:$0xf] %vm540, %v530
        %548 = vst.msk [vmem:[%s317 + $0x1c] sm:$0xf] %vm540, %v531
        %s549 = scalar_lea.vmem %s294, 4
        %v550 = vld [vmem:[%s549] sm:$0xf]
        %v552 = vsel %vm368, %v550, 0
        %554 = vmatprep.subr.bf16.mxu0 0
        %555 = vmatpush1.bf16.msra.mxu0 0
        %556 = vmatprep.subr.bf16.mxu0 0
        %557 = vmatpush1.bf16.msra.mxu0 0
        %558 = vmatprep.subr.bf16.mxu0 0
        %559 = vmatpush1.bf16.msra.mxu0 0
        %560 = vmatprep.subr.bf16.mxu0 0
        %561 = vmatpush1.bf16.msra.mxu0 0
        %562 = vmatprep.subr.bf16.mxu0 0
        %563 = vmatpush1.bf16.msra.mxu0 0
        %564 = vmatprep.subr.bf16.mxu0 0
        %565 = vmatpush1.bf16.msra.mxu0 0
        %566 = vmatprep.subr.bf16.mxu0 0
        %567 = vmatpush1.bf16.msra.mxu0 %v366
        %568 = vmatprep.subr.bf16.mxu0 0
        %569 = vmatpush1.bf16.msra.mxu0 %v365
        %570 = vmatprep.subr.bf16.mxu0 0
        %571 = vmatpush2.bf16.msra.mxu0 0
        %572 = vmatprep.subr.bf16.mxu0 0
        %573 = vmatpush2.bf16.msra.mxu0 0
        %574 = vmatprep.subr.bf16.mxu0 0
        %575 = vmatpush2.bf16.msra.mxu0 0
        %576 = vmatprep.subr.bf16.mxu0 0
        %577 = vmatpush2.bf16.msra.mxu0 0
        %578 = vmatprep.subr.bf16.mxu0 0
        %579 = vmatpush2.bf16.msra.mxu0 0
        %580 = vmatprep.subr.bf16.mxu0 0
        %581 = vmatpush2.bf16.msra.mxu0 0
        %582 = vmatprep.subr.bf16.mxu0 0
        %583 = vmatpush2.bf16.msra.mxu0 0
        %584 = vmatprep.subr.bf16.mxu0 0
        %585 = vmatpush2.bf16.msra.mxu0 0
        %586 = vmatprep.mubr.bf16.mxu0 0
        %587 = vmatmul.mubr.bf16.gmra.mxu0 %v552
        %v588 = vpop.f32.mrf.mxu0
        %v589 = vadd.f32 0.0, %v588
        %v590 = vpop.f32.mrf.mxu0
        %v591 = vpop.f32.mrf.mxu0
        %v592 = vpop.f32.mrf.mxu0
        %593 = vdwg.mxu0
        %v594 = vpack.c.bf16 %v589, %v589
        %s595 = scalar_lea.vmem %s263, 4 [#allocation2]
        %596 = vst.msk [vmem:[%s595] sm:$0xf] %vm413, %v594
        %s597 = scalar_lea.vmem %s301, 16
        %v598 = vld [vmem:[%s597] sm:$0xf]
        %v599 = vld [vmem:[%s597 + $0x4] sm:$0xf]
        %v600 = vld [vmem:[%s597 + $0x8] sm:$0xf]
        %v601 = vld [vmem:[%s597 + $0xc] sm:$0xf]
        %v606 = vunpack.c.l.b16 %v598
        %v607 = vunpack.c.l.b16 %v599
        %v608 = vunpack.c.l.b16 %v600
        %v609 = vunpack.c.l.b16 %v601
        %v610 = vpack.c.b16 %v607, %v606
        %v611 = vpack.c.b16 %v609, %v608
        %614 = vmatprep.subr.bf16.mxu0 0
        %615 = vmatpush1.bf16.msra.mxu0 0
        %616 = vmatprep.subr.bf16.mxu0 0
        %617 = vmatpush1.bf16.msra.mxu0 0
        %618 = vmatprep.subr.bf16.mxu0 0
        %619 = vmatpush1.bf16.msra.mxu0 0
        %620 = vmatprep.subr.bf16.mxu0 0
        %621 = vmatpush1.bf16.msra.mxu0 0
        %622 = vmatprep.subr.bf16.mxu0 0
        %623 = vmatpush1.bf16.msra.mxu0 0
        %624 = vmatprep.subr.bf16.mxu0 0
        %625 = vmatpush1.bf16.msra.mxu0 0
        %626 = vmatprep.subr.bf16.mxu0 0
        %627 = vmatpush1.bf16.msra.mxu0 %v611
        %628 = vmatprep.subr.bf16.mxu0 0
        %629 = vmatpush1.bf16.msra.mxu0 %v610
        %630 = vmatprep.subr.bf16.mxu0 0
        %631 = vmatpush2.bf16.msra.mxu0 0
        %632 = vmatprep.subr.bf16.mxu0 0
        %633 = vmatpush2.bf16.msra.mxu0 0
        %634 = vmatprep.subr.bf16.mxu0 0
        %635 = vmatpush2.bf16.msra.mxu0 0
        %636 = vmatprep.subr.bf16.mxu0 0
        %637 = vmatpush2.bf16.msra.mxu0 0
        %638 = vmatprep.subr.bf16.mxu0 0
        %639 = vmatpush2.bf16.msra.mxu0 0
        %640 = vmatprep.subr.bf16.mxu0 0
        %641 = vmatpush2.bf16.msra.mxu0 0
        %642 = vmatprep.subr.bf16.mxu0 0
        %643 = vmatpush2.bf16.msra.mxu0 0
        %644 = vmatprep.subr.bf16.mxu0 0
        %645 = vmatpush2.bf16.msra.mxu0 0
        %646 = vmatprep.mubr.bf16.mxu0 0
        %647 = vmatmul.mubr.bf16.gmra.mxu0 %v432
        %v648 = vpop.f32.mrf.mxu0
        %v649 = vadd.f32 0.0, %v648
        %v650 = vpop.f32.mrf.mxu0
        %v651 = vpop.f32.mrf.mxu0
        %v652 = vadd.f32 0.0, %v651
        %v653 = vpop.f32.mrf.mxu0
        %654 = vmatprep.mubr.bf16.mxu0 0
        %655 = vmatmul.mubr.bf16.gmra.mxu0 %v435
        %v656 = vpop.f32.mrf.mxu0
        %v657 = vadd.f32 0.0, %v656
        %v658 = vpop.f32.mrf.mxu0
        %v659 = vpop.f32.mrf.mxu0
        %v660 = vadd.f32 0.0, %v659
        %v661 = vpop.f32.mrf.mxu0
        %662 = vmatprep.mubr.bf16.mxu0 0
        %663 = vmatmul.mubr.bf16.gmra.mxu0 %v438
        %v664 = vpop.f32.mrf.mxu0
        %v665 = vadd.f32 0.0, %v664
        %v666 = vpop.f32.mrf.mxu0
        %v667 = vpop.f32.mrf.mxu0
        %v668 = vadd.f32 0.0, %v667
        %v669 = vpop.f32.mrf.mxu0
        %670 = vmatprep.mubr.bf16.mxu0 0
        %671 = vmatmul.mubr.bf16.gmra.mxu0 %v441
        %v672 = vpop.f32.mrf.mxu0
        %v673 = vadd.f32 0.0, %v672
        %v674 = vpop.f32.mrf.mxu0
        %v675 = vpop.f32.mrf.mxu0
        %v676 = vadd.f32 0.0, %v675
        %v677 = vpop.f32.mrf.mxu0
        %678 = vdwg.mxu0
        %v679 = vpack.c.bf16 %v652, %v649
        %v680 = vpack.c.bf16 %v660, %v657
        %v681 = vpack.c.bf16 %v668, %v665
        %v682 = vpack.c.bf16 %v676, %v673
        %v687 = vunpack.c.l.b16 %v679
        %v688 = vunpack.c.h.b16 %v679
        %v689 = vunpack.c.l.b16 %v680
        %v690 = vunpack.c.h.b16 %v680
        %v691 = vunpack.c.l.b16 %v681
        %v692 = vunpack.c.h.b16 %v681
        %v693 = vunpack.c.l.b16 %v682
        %v694 = vunpack.c.h.b16 %v682
        %v695 = vpack.c.b16 %v687, %v687
        %v696 = vpack.c.b16 %v688, %v688
        %v697 = vpack.c.b16 %v689, %v689
        %v698 = vpack.c.b16 %v690, %v690
        %v699 = vpack.c.b16 %v691, %v691
        %v700 = vpack.c.b16 %v692, %v692
        %v701 = vpack.c.b16 %v693, %v693
        %v702 = vpack.c.b16 %v694, %v694
        %s711 = scalar_lea.vmem %s317, 32
        %712 = vst.msk [vmem:[%s711] sm:$0xf] %vm540, %v695
        %713 = vst.msk [vmem:[%s711 + $0x4] sm:$0xf] %vm540, %v696
        %714 = vst.msk [vmem:[%s711 + $0x8] sm:$0xf] %vm540, %v697
        %715 = vst.msk [vmem:[%s711 + $0xc] sm:$0xf] %vm540, %v698
        %716 = vst.msk [vmem:[%s711 + $0x10] sm:$0xf] %vm540, %v699
        %717 = vst.msk [vmem:[%s711 + $0x14] sm:$0xf] %vm540, %v700
        %718 = vst.msk [vmem:[%s711 + $0x18] sm:$0xf] %vm540, %v701
        %719 = vst.msk [vmem:[%s711 + $0x1c] sm:$0xf] %vm540, %v702
        %s720 = scalar_lea.vmem %s294, 8
        %v721 = vld [vmem:[%s720] sm:$0xf]
        %v723 = vsel %vm368, %v721, 0
        %725 = vmatprep.subr.bf16.mxu0 0
        %726 = vmatpush1.bf16.msra.mxu0 0
        %727 = vmatprep.subr.bf16.mxu0 0
        %728 = vmatpush1.bf16.msra.mxu0 0
        %729 = vmatprep.subr.bf16.mxu0 0
        %730 = vmatpush1.bf16.msra.mxu0 0
        %731 = vmatprep.subr.bf16.mxu0 0
        %732 = vmatpush1.bf16.msra.mxu0 0
        %733 = vmatprep.subr.bf16.mxu0 0
        %734 = vmatpush1.bf16.msra.mxu0 0
        %735 = vmatprep.subr.bf16.mxu0 0
        %736 = vmatpush1.bf16.msra.mxu0 0
        %737 = vmatprep.subr.bf16.mxu0 0
        %738 = vmatpush1.bf16.msra.mxu0 %v366
        %739 = vmatprep.subr.bf16.mxu0 0
        %740 = vmatpush1.bf16.msra.mxu0 %v365
        %741 = vmatprep.subr.bf16.mxu0 0
        %742 = vmatpush2.bf16.msra.mxu0 0
        %743 = vmatprep.subr.bf16.mxu0 0
        %744 = vmatpush2.bf16.msra.mxu0 0
        %745 = vmatprep.subr.bf16.mxu0 0
        %746 = vmatpush2.bf16.msra.mxu0 0
        %747 = vmatprep.subr.bf16.mxu0 0
        %748 = vmatpush2.bf16.msra.mxu0 0
        %749 = vmatprep.subr.bf16.mxu0 0
        %750 = vmatpush2.bf16.msra.mxu0 0
        %751 = vmatprep.subr.bf16.mxu0 0
        %752 = vmatpush2.bf16.msra.mxu0 0
        %753 = vmatprep.subr.bf16.mxu0 0
        %754 = vmatpush2.bf16.msra.mxu0 0
        %755 = vmatprep.subr.bf16.mxu0 0
        %756 = vmatpush2.bf16.msra.mxu0 0
        %757 = vmatprep.mubr.bf16.mxu0 0
        %758 = vmatmul.mubr.bf16.gmra.mxu0 %v723
        %v759 = vpop.f32.mrf.mxu0
        %v760 = vadd.f32 0.0, %v759
        %v761 = vpop.f32.mrf.mxu0
        %v762 = vpop.f32.mrf.mxu0
        %v763 = vpop.f32.mrf.mxu0
        %764 = vdwg.mxu0
        %v765 = vpack.c.bf16 %v760, %v760
        %s766 = scalar_lea.vmem %s263, 8 [#allocation2]
        %767 = vst.msk [vmem:[%s766] sm:$0xf] %vm413, %v765
        %s768 = scalar_lea.vmem %s301, 32
        %v769 = vld [vmem:[%s768] sm:$0xf]
        %v770 = vld [vmem:[%s768 + $0x4] sm:$0xf]
        %v771 = vld [vmem:[%s768 + $0x8] sm:$0xf]
        %v772 = vld [vmem:[%s768 + $0xc] sm:$0xf]
        %v777 = vunpack.c.l.b16 %v769
        %v778 = vunpack.c.l.b16 %v770
        %v779 = vunpack.c.l.b16 %v771
        %v780 = vunpack.c.l.b16 %v772
        %v781 = vpack.c.b16 %v778, %v777
        %v782 = vpack.c.b16 %v780, %v779
        %785 = vmatprep.subr.bf16.mxu0 0
        %786 = vmatpush1.bf16.msra.mxu0 0
        %787 = vmatprep.subr.bf16.mxu0 0
        %788 = vmatpush1.bf16.msra.mxu0 0
        %789 = vmatprep.subr.bf16.mxu0 0
        %790 = vmatpush1.bf16.msra.mxu0 0
        %791 = vmatprep.subr.bf16.mxu0 0
        %792 = vmatpush1.bf16.msra.mxu0 0
        %793 = vmatprep.subr.bf16.mxu0 0
        %794 = vmatpush1.bf16.msra.mxu0 0
        %795 = vmatprep.subr.bf16.mxu0 0
        %796 = vmatpush1.bf16.msra.mxu0 0
        %797 = vmatprep.subr.bf16.mxu0 0
        %798 = vmatpush1.bf16.msra.mxu0 %v782
        %799 = vmatprep.subr.bf16.mxu0 0
        %800 = vmatpush1.bf16.msra.mxu0 %v781
        %801 = vmatprep.subr.bf16.mxu0 0
        %802 = vmatpush2.bf16.msra.mxu0 0
        %803 = vmatprep.subr.bf16.mxu0 0
        %804 = vmatpush2.bf16.msra.mxu0 0
        %805 = vmatprep.subr.bf16.mxu0 0
        %806 = vmatpush2.bf16.msra.mxu0 0
        %807 = vmatprep.subr.bf16.mxu0 0
        %808 = vmatpush2.bf16.msra.mxu0 0
        %809 = vmatprep.subr.bf16.mxu0 0
        %810 = vmatpush2.bf16.msra.mxu0 0
        %811 = vmatprep.subr.bf16.mxu0 0
        %812 = vmatpush2.bf16.msra.mxu0 0
        %813 = vmatprep.subr.bf16.mxu0 0
        %814 = vmatpush2.bf16.msra.mxu0 0
        %815 = vmatprep.subr.bf16.mxu0 0
        %816 = vmatpush2.bf16.msra.mxu0 0
        %817 = vmatprep.mubr.bf16.mxu0 0
        %818 = vmatmul.mubr.bf16.gmra.mxu0 %v432
        %v819 = vpop.f32.mrf.mxu0
        %v820 = vadd.f32 0.0, %v819
        %v821 = vpop.f32.mrf.mxu0
        %v822 = vpop.f32.mrf.mxu0
        %v823 = vadd.f32 0.0, %v822
        %v824 = vpop.f32.mrf.mxu0
        %825 = vmatprep.mubr.bf16.mxu0 0
        %826 = vmatmul.mubr.bf16.gmra.mxu0 %v435
        %v827 = vpop.f32.mrf.mxu0
        %v828 = vadd.f32 0.0, %v827
        %v829 = vpop.f32.mrf.mxu0
        %v830 = vpop.f32.mrf.mxu0
        %v831 = vadd.f32 0.0, %v830
        %v832 = vpop.f32.mrf.mxu0
        %833 = vmatprep.mubr.bf16.mxu0 0
        %834 = vmatmul.mubr.bf16.gmra.mxu0 %v438
        %v835 = vpop.f32.mrf.mxu0
        %v836 = vadd.f32 0.0, %v835
        %v837 = vpop.f32.mrf.mxu0
        %v838 = vpop.f32.mrf.mxu0
        %v839 = vadd.f32 0.0, %v838
        %v840 = vpop.f32.mrf.mxu0
        %841 = vmatprep.mubr.bf16.mxu0 0
        %842 = vmatmul.mubr.bf16.gmra.mxu0 %v441
        %v843 = vpop.f32.mrf.mxu0
        %v844 = vadd.f32 0.0, %v843
        %v845 = vpop.f32.mrf.mxu0
        %v846 = vpop.f32.mrf.mxu0
        %v847 = vadd.f32 0.0, %v846
        %v848 = vpop.f32.mrf.mxu0
        %849 = vdwg.mxu0
        %v850 = vpack.c.bf16 %v823, %v820
        %v851 = vpack.c.bf16 %v831, %v828
        %v852 = vpack.c.bf16 %v839, %v836
        %v853 = vpack.c.bf16 %v847, %v844
        %v858 = vunpack.c.l.b16 %v850
        %v859 = vunpack.c.h.b16 %v850
        %v860 = vunpack.c.l.b16 %v851
        %v861 = vunpack.c.h.b16 %v851
        %v862 = vunpack.c.l.b16 %v852
        %v863 = vunpack.c.h.b16 %v852
        %v864 = vunpack.c.l.b16 %v853
        %v865 = vunpack.c.h.b16 %v853
        %v866 = vpack.c.b16 %v858, %v858
        %v867 = vpack.c.b16 %v859, %v859
        %v868 = vpack.c.b16 %v860, %v860
        %v869 = vpack.c.b16 %v861, %v861
        %v870 = vpack.c.b16 %v862, %v862
        %v871 = vpack.c.b16 %v863, %v863
        %v872 = vpack.c.b16 %v864, %v864
        %v873 = vpack.c.b16 %v865, %v865
        %s882 = scalar_lea.vmem %s317, 64
        %883 = vst.msk [vmem:[%s882] sm:$0xf] %vm540, %v866
        %884 = vst.msk [vmem:[%s882 + $0x4] sm:$0xf] %vm540, %v867
        %885 = vst.msk [vmem:[%s882 + $0x8] sm:$0xf] %vm540, %v868
        %886 = vst.msk [vmem:[%s882 + $0xc] sm:$0xf] %vm540, %v869
        %887 = vst.msk [vmem:[%s882 + $0x10] sm:$0xf] %vm540, %v870
        %888 = vst.msk [vmem:[%s882 + $0x14] sm:$0xf] %vm540, %v871
        %889 = vst.msk [vmem:[%s882 + $0x18] sm:$0xf] %vm540, %v872
        %890 = vst.msk [vmem:[%s882 + $0x1c] sm:$0xf] %vm540, %v873
        %s891 = scalar_lea.vmem %s294, 12
        %v892 = vld [vmem:[%s891] sm:$0xf]
        %v894 = vsel %vm368, %v892, 0
        %896 = vmatprep.subr.bf16.mxu0 0
        %897 = vmatpush1.bf16.msra.mxu0 0
        %898 = vmatprep.subr.bf16.mxu0 0
        %899 = vmatpush1.bf16.msra.mxu0 0
        %900 = vmatprep.subr.bf16.mxu0 0
        %901 = vmatpush1.bf16.msra.mxu0 0
        %902 = vmatprep.subr.bf16.mxu0 0
        %903 = vmatpush1.bf16.msra.mxu0 0
        %904 = vmatprep.subr.bf16.mxu0 0
        %905 = vmatpush1.bf16.msra.mxu0 0
        %906 = vmatprep.subr.bf16.mxu0 0
        %907 = vmatpush1.bf16.msra.mxu0 0
        %908 = vmatprep.subr.bf16.mxu0 0
        %909 = vmatpush1.bf16.msra.mxu0 %v366
        %910 = vmatprep.subr.bf16.mxu0 0
        %911 = vmatpush1.bf16.msra.mxu0 %v365
        %912 = vmatprep.subr.bf16.mxu0 0
        %913 = vmatpush2.bf16.msra.mxu0 0
        %914 = vmatprep.subr.bf16.mxu0 0
        %915 = vmatpush2.bf16.msra.mxu0 0
        %916 = vmatprep.subr.bf16.mxu0 0
        %917 = vmatpush2.bf16.msra.mxu0 0
        %918 = vmatprep.subr.bf16.mxu0 0
        %919 = vmatpush2.bf16.msra.mxu0 0
        %920 = vmatprep.subr.bf16.mxu0 0
        %921 = vmatpush2.bf16.msra.mxu0 0
        %922 = vmatprep.subr.bf16.mxu0 0
        %923 = vmatpush2.bf16.msra.mxu0 0
        %924 = vmatprep.subr.bf16.mxu0 0
        %925 = vmatpush2.bf16.msra.mxu0 0
        %926 = vmatprep.subr.bf16.mxu0 0
        %927 = vmatpush2.bf16.msra.mxu0 0
        %928 = vmatprep.mubr.bf16.mxu0 0
        %929 = vmatmul.mubr.bf16.gmra.mxu0 %v894
        %v930 = vpop.f32.mrf.mxu0
        %v931 = vadd.f32 0.0, %v930
        %v932 = vpop.f32.mrf.mxu0
        %v933 = vpop.f32.mrf.mxu0
        %v934 = vpop.f32.mrf.mxu0
        %935 = vdwg.mxu0
        %v936 = vpack.c.bf16 %v931, %v931
        %s937 = scalar_lea.vmem %s263, 12 [#allocation2]
        %938 = vst.msk [vmem:[%s937] sm:$0xf] %vm413, %v936
        %s939 = scalar_lea.vmem %s301, 48
        %v940 = vld [vmem:[%s939] sm:$0xf]
        %v941 = vld [vmem:[%s939 + $0x4] sm:$0xf]
        %v942 = vld [vmem:[%s939 + $0x8] sm:$0xf]
        %v943 = vld [vmem:[%s939 + $0xc] sm:$0xf]
        %v948 = vunpack.c.l.b16 %v940
        %v949 = vunpack.c.l.b16 %v941
        %v950 = vunpack.c.l.b16 %v942
        %v951 = vunpack.c.l.b16 %v943
        %v952 = vpack.c.b16 %v949, %v948
        %v953 = vpack.c.b16 %v951, %v950
        %956 = vmatprep.subr.bf16.mxu0 0
        %957 = vmatpush1.bf16.msra.mxu0 0
        %958 = vmatprep.subr.bf16.mxu0 0
        %959 = vmatpush1.bf16.msra.mxu0 0
        %960 = vmatprep.subr.bf16.mxu0 0
        %961 = vmatpush1.bf16.msra.mxu0 0
        %962 = vmatprep.subr.bf16.mxu0 0
        %963 = vmatpush1.bf16.msra.mxu0 0
        %964 = vmatprep.subr.bf16.mxu0 0
        %965 = vmatpush1.bf16.msra.mxu0 0
        %966 = vmatprep.subr.bf16.mxu0 0
        %967 = vmatpush1.bf16.msra.mxu0 0
        %968 = vmatprep.subr.bf16.mxu0 0
        %969 = vmatpush1.bf16.msra.mxu0 %v953
        %970 = vmatprep.subr.bf16.mxu0 0
        %971 = vmatpush1.bf16.msra.mxu0 %v952
        %972 = vmatprep.subr.bf16.mxu0 0
        %973 = vmatpush2.bf16.msra.mxu0 0
        %974 = vmatprep.subr.bf16.mxu0 0
        %975 = vmatpush2.bf16.msra.mxu0 0
        %976 = vmatprep.subr.bf16.mxu0 0
        %977 = vmatpush2.bf16.msra.mxu0 0
        %978 = vmatprep.subr.bf16.mxu0 0
        %979 = vmatpush2.bf16.msra.mxu0 0
        %980 = vmatprep.subr.bf16.mxu0 0
        %981 = vmatpush2.bf16.msra.mxu0 0
        %982 = vmatprep.subr.bf16.mxu0 0
        %983 = vmatpush2.bf16.msra.mxu0 0
        %984 = vmatprep.subr.bf16.mxu0 0
        %985 = vmatpush2.bf16.msra.mxu0 0
        %986 = vmatprep.subr.bf16.mxu0 0
        %987 = vmatpush2.bf16.msra.mxu0 0
        %988 = vmatprep.mubr.bf16.mxu0 0
        %989 = vmatmul.mubr.bf16.gmra.mxu0 %v432
        %v990 = vpop.f32.mrf.mxu0
        %v991 = vadd.f32 0.0, %v990
        %v992 = vpop.f32.mrf.mxu0
        %v993 = vpop.f32.mrf.mxu0
        %v994 = vadd.f32 0.0, %v993
        %v995 = vpop.f32.mrf.mxu0
        %996 = vmatprep.mubr.bf16.mxu0 0
        %997 = vmatmul.mubr.bf16.gmra.mxu0 %v435
        %v998 = vpop.f32.mrf.mxu0
        %v999 = vadd.f32 0.0, %v998
        %v1000 = vpop.f32.mrf.mxu0
        %v1001 = vpop.f32.mrf.mxu0
        %v1002 = vadd.f32 0.0, %v1001
        %v1003 = vpop.f32.mrf.mxu0
        %1004 = vmatprep.mubr.bf16.mxu0 0
        %1005 = vmatmul.mubr.bf16.gmra.mxu0 %v438
        %v1006 = vpop.f32.mrf.mxu0
        %v1007 = vadd.f32 0.0, %v1006
        %v1008 = vpop.f32.mrf.mxu0
        %v1009 = vpop.f32.mrf.mxu0
        %v1010 = vadd.f32 0.0, %v1009
        %v1011 = vpop.f32.mrf.mxu0
        %1012 = vmatprep.mubr.bf16.mxu0 0
        %1013 = vmatmul.mubr.bf16.gmra.mxu0 %v441
        %v1014 = vpop.f32.mrf.mxu0
        %v1015 = vadd.f32 0.0, %v1014
        %v1016 = vpop.f32.mrf.mxu0
        %v1017 = vpop.f32.mrf.mxu0
        %v1018 = vadd.f32 0.0, %v1017
        %v1019 = vpop.f32.mrf.mxu0
        %1020 = vdwg.mxu0
        %v1021 = vpack.c.bf16 %v994, %v991
        %v1022 = vpack.c.bf16 %v1002, %v999
        %v1023 = vpack.c.bf16 %v1010, %v1007
        %v1024 = vpack.c.bf16 %v1018, %v1015
        %v1029 = vunpack.c.l.b16 %v1021
        %v1030 = vunpack.c.h.b16 %v1021
        %v1031 = vunpack.c.l.b16 %v1022
        %v1032 = vunpack.c.h.b16 %v1022
        %v1033 = vunpack.c.l.b16 %v1023
        %v1034 = vunpack.c.h.b16 %v1023
        %v1035 = vunpack.c.l.b16 %v1024
        %v1036 = vunpack.c.h.b16 %v1024
        %v1037 = vpack.c.b16 %v1029, %v1029
        %v1038 = vpack.c.b16 %v1030, %v1030
        %v1039 = vpack.c.b16 %v1031, %v1031
        %v1040 = vpack.c.b16 %v1032, %v1032
        %v1041 = vpack.c.b16 %v1033, %v1033
        %v1042 = vpack.c.b16 %v1034, %v1034
        %v1043 = vpack.c.b16 %v1035, %v1035
        %v1044 = vpack.c.b16 %v1036, %v1036
        %s1053 = scalar_lea.vmem %s317, 96
        %1054 = vst.msk [vmem:[%s1053] sm:$0xf] %vm540, %v1037
        %1055 = vst.msk [vmem:[%s1053 + $0x4] sm:$0xf] %vm540, %v1038
        %1056 = vst.msk [vmem:[%s1053 + $0x8] sm:$0xf] %vm540, %v1039
        %1057 = vst.msk [vmem:[%s1053 + $0xc] sm:$0xf] %vm540, %v1040
        %1058 = vst.msk [vmem:[%s1053 + $0x10] sm:$0xf] %vm540, %v1041
        %1059 = vst.msk [vmem:[%s1053 + $0x14] sm:$0xf] %vm540, %v1042
        %1060 = vst.msk [vmem:[%s1053 + $0x18] sm:$0xf] %vm540, %v1043
        %1061 = vst.msk [vmem:[%s1053 + $0x1c] sm:$0xf] %vm540, %v1044
        %s1062 = sand.u32 %s130, 1
        %s1063 = scalar_lea.sflag [#allocation3], %s1062
        %s1064 = sand.u32 %s130, 1
        %s1065 = smul.addr %s1064, 16
        %s1066 = scalar_lea.vmem [#allocation2], %s1065
        %s1067 = smul.u32 4, %s24
        %s1068 = smul.u32 8, %s26
        %p1069 = scmp.lt.s32.totalorder %s25, 1
        %s1070 = scalar_select %p1069, %s25, 1
        %p1071 = scmp.lt.s32.totalorder %s1067, 3
        %s1072 = scalar_select %p1071, %s1067, 3
        %p1073 = scmp.lt.s32.totalorder %s1068, 7
        %s1074 = scalar_select %p1073, %s1068, 7
        %s1075 = smul.addr %s1072, 8
        %s1076 = sadd.s32 %s1074, %s1075
        %s1077 = smul.addr %s1070, 32
        %s1078 = sadd.s32 %s1076, %s1077
        %s1079 = smul.addr %s1078, 4
        %s1080 = scalar_lea.vmem %s4, %s1079
        // Predicated region
        $region33: #{tpu_custom_call.1} parent=31 // pred_check
          %p1081 = pneg %p140
        $region34: #{tpu_custom_call.1} parent=31 // pred_check_branch
          %1083 = sbr.rel (%p1081) target = $region36
        $region35: #{tpu_custom_call.1} parent=31 // pred_region
          %s1084 = smul.u32 4, %s24
          %s1086 = ssub.s32 256, 256
          %1087 = vsyncadd %s1063, %s1086
          %s1088 = sadd.s32 %s26, %s1084
          %s1089 = smul.addr %s25, 4
          %s1090 = sadd.s32 %s1088, %s1089
          %s1091 = smul.addr %s1090, 64
          %s1092 = scalar_lea.hbm %s3, %s1091
          %s1093 = sshll.u32 %s1066, 4
          %s1094 = int_to_ptr.vmem [resolvable:$true] %s1093
          %1099 = dma.vmem_to_hbm [thread:$0]  %s1094, 256, %s1092, %s1063, 64, 64, 4
        $region36: #{tpu_custom_call.1} parent=31 // pred_fallthru
          _
        // Predicated region
        $region37: #{tpu_custom_call.1} parent=31 // pred_check
          %p1100 = pneg %p170
        $region38: #{tpu_custom_call.1} parent=31 // pred_check_branch
          %1102 = sbr.rel (%p1100) target = $region40
        $region39: #{tpu_custom_call.1} parent=31 // pred_region
          %s1103 = smul.u32 4, %s24
          %s1104 = smul.u32 8, %s26
        $region40: #{tpu_custom_call.1} parent=31 // pred_fallthru
          _
      $region32: #{tpu_custom_call.1} parent=5 // pred_fallthru
        _
      %p1105 = scmp.le.s32.totalorder 2, %s14
      // Predicated region
      $region41: #{tpu_custom_call.1} parent=5 // pred_check
        %p1106 = pneg %p1105
      $region42: #{tpu_custom_call.1} parent=5 // pred_check_branch
        %1108 = sbr.rel (%p1106) target = $region44
      $region43: #{tpu_custom_call.1} parent=5 // pred_region
        %s1109 = ssub.s32 %s14, 2
        // Predicated region
        $region45: #{tpu_custom_call.1} parent=43 // pred_check
          %p1110 = pneg %p146
        $region46: #{tpu_custom_call.1} parent=43 // pred_check_branch
          %1112 = sbr.rel (%p1110) target = $region48
        $region47: #{tpu_custom_call.1} parent=43 // pred_region
          %s1113 = sand.u32 %s131, 1
          %s1114 = scalar_lea.sflag [#allocation3], %s1113
          %s1115 = sand.u32 %s131, 1
          %s1116 = smul.addr %s1115, 16
          %s1117 = scalar_lea.vmem [#allocation2], %s1116
          %1118 = dma.done %s1114, 256
        $region48: #{tpu_custom_call.1} parent=43 // pred_fallthru
          _
        // Predicated region
        $region49: #{tpu_custom_call.1} parent=43 // pred_check
          %p1119 = pneg %p176
        $region50: #{tpu_custom_call.1} parent=43 // pred_check_branch
          %1121 = sbr.rel (%p1119) target = $region52
        $region51: #{tpu_custom_call.1} parent=43 // pred_region
          %s1122 = smul.u32 4, %s27
          %s1123 = smul.u32 8, %s29
          %p1124 = scmp.lt.s32.totalorder %s28, 1
          %s1125 = scalar_select %p1124, %s28, 1
          %p1126 = scmp.lt.s32.totalorder %s1122, 3
          %s1127 = scalar_select %p1126, %s1122, 3
          %p1128 = scmp.lt.s32.totalorder %s1123, 7
          %s1129 = scalar_select %p1128, %s1123, 7
          %s1130 = smul.addr %s1127, 8
          %s1131 = sadd.s32 %s1129, %s1130
          %s1132 = smul.addr %s1125, 32
          %s1133 = sadd.s32 %s1131, %s1132
          %s1134 = smul.addr %s1133, 4
          %s1135 = scalar_lea.vmem %s4, %s1134
        $region52: #{tpu_custom_call.1} parent=43 // pred_fallthru
          _
      $region44: #{tpu_custom_call.1} parent=5 // pred_fallthru
        _
    $region6: #{tpu_custom_call.1} parent=1 // loop_footer
      %s18 = sadd.s32 1, %s14
    $region7: #{tpu_custom_call.1} parent=1 // loop_footer_branch
      %13 = sbr.rel target = $region3
    $region8: #{tpu_custom_call.1} parent=1 // loop_exit
      _
    %1136 = vsyncpa [#allocation3], 1
    %s1137 = scalar_lea.sflag [#allocation3], 1
    %1138 = vsyncpa %s1137, 1

</llo_original>
